<compile_context>
chip_gen: v5e
topology: v5e:2x2
jax: 0.10.0
libtpu: 0.0.40
codegen_flags: <defaults>
</compile_context>

<pallas_src>
import functools

import jax
import jax.numpy as jnp
from jax.experimental import pallas as pl
from jax.experimental.pallas import tpu as pltpu


def _cirm_kernel(x_ref, o_ref, *, k, c_half):
    # Elementwise hot path: k * tanh(c_half * x). tanh goes to the EUP, the
    # multiplies to the VPU; the kernel is purely HBM-bandwidth bound.
    x = x_ref[...].astype(jnp.float32)
    o_ref[...] = (k * jnp.tanh(c_half * x)).astype(o_ref.dtype)


def _min_grid_steps():
    """Minimum grid steps so every TensorCore gets >= 2 pipelined steps."""
    try:
        kind = jax.devices()[0].device_kind.lower()
    except Exception:  # pragma: no cover - defensive, e.g. no devices yet
        kind = ""
    # v7x-class chips have 2 TensorCores per chip; older generations have 1.
    two_tc = ("v7" in kind) or ("7x" in kind)
    return 4 if two_tc else 2


def _choose_layout(n_elems, itemsize, min_steps):
    """Pick (lanes, block_rows, n_padded) for a lane-dense 2-D slab.

    lanes      : last-dim width (multiple of 128, lane-dense unmasked stores)
    block_rows : rows per grid step (multiple of 8; array rows need NOT divide it)
    n_padded   : total elements after the at-most-127-element pad (== n when
                 n % 128 == 0, i.e. the common path is copy-free).
    """
    candidates = (2048, 1024, 512, 256, 128)

    if n_elems % 128 == 0:
        # No pad needed; pick the widest lane width that divides n exactly and
        # still yields >= 8 rows (at least one full vreg tall).
        lanes = 128
        for w in candidates:
            if n_elems % w == 0 and n_elems >= 8 * w:
                lanes = w
                break
        n_padded = n_elems
    else:
        # Ragged tail: force 128 lanes so the single pad is < 128 elements.
        lanes = 128
        n_padded = -(-n_elems // 128) * 128

    n_rows = n_padded // lanes
    rows8 = -(-n_rows // 8) * 8                     # sublane-rounded row cap

    # ~4 MiB per block (byte-based, so bf16/fp16 keep f32-sized DMA streams),
    # rounded down to a multiple of 8 rows and capped at the slab height.
    target_bytes = 4 << 20
    block_rows = max(8, (target_bytes // (lanes * itemsize)) // 8 * 8)
    block_rows = min(block_rows, rows8)

    # If the whole slab would be a single block but carries a meaningful amount
    # of data, split it so each TensorCore gets >= 2 pipelined grid steps
    # (min_steps = 4 on 2-TC chips, 2 otherwise).
    slab_bytes = n_rows * lanes * itemsize
    threshold = (1 << 20) if min_steps <= 2 else (2 << 20)
    if block_rows >= n_rows and slab_bytes >= threshold and n_rows >= 8 * min_steps:
        block_rows = max(8, (n_rows // min_steps) // 8 * 8)

    return lanes, block_rows, n_padded


def cirm_loss(x, k=10.0, c=0.1):
    """Applies y = k * tanh(c * x / 2) elementwise via a Pallas TPU kernel."""
    # NOTE: k and c are fixed Python scalars in the module (not tracers); they
    # are folded into the kernel as constants (c_half = c / 2).
    orig_shape = x.shape
    orig_dtype = x.dtype
    n = x.size
    itemsize = jnp.dtype(orig_dtype).itemsize

    min_steps = _min_grid_steps()
    lanes, block_rows, n_padded = _choose_layout(n, itemsize, min_steps)

    x_flat = x.reshape(-1)
    if n_padded != n:
        # Single sub-128-element pad so the slab is lane-dense; sliced off below.
        x_flat = jnp.pad(x_flat, (0, n_padded - n))
    n_rows = n_padded // lanes
    x2d = x_flat.reshape(n_rows, lanes)

    grid = (pl.cdiv(n_rows, block_rows),)
    kernel = functools.partial(_cirm_kernel, k=float(k), c_half=float(c) * 0.5)

    out2d = pl.pallas_call(
        kernel,
        out_shape=jax.ShapeDtypeStruct((n_rows, lanes), orig_dtype),
        grid_spec=pltpu.PrefetchScalarGridSpec(
            num_scalar_prefetch=0,
            grid=grid,
            in_specs=[pl.BlockSpec((block_rows, lanes), lambda i: (i, 0))],
            out_specs=pl.BlockSpec((block_rows, lanes), lambda i: (i, 0)),
        ),
        compiler_params=pltpu.CompilerParams(
            dimension_semantics=("parallel",),
            # 4 MiB blocks, double-buffered in + out = 16 MiB, which is exactly
            # v5e's scoped default; 32 MiB gives headroom there and on v6e
            # while staying well under v7x's 64 MiB per-TensorCore VMEM.
            vmem_limit_bytes=32 * 1024 * 1024,
        ),
        cost_estimate=pl.CostEstimate(
            flops=2 * n,
            transcendentals=n,
            bytes_accessed=2 * n * itemsize,
        ),
    )(x2d)

    if n_padded == n:
        # Common path: no pad was added, so no slice/copy — just a reshape.
        return out2d.reshape(orig_shape)
    return out2d.reshape(-1)[:n].reshape(orig_shape)


if __name__ == "__main__":
    # CIRMLoss has no learnable parameters; k and c are fixed scalars.
    k, c = 10.0, 0.1
    key = jax.random.PRNGKey(0)

    def _ref(x):
        return k * jnp.tanh(c * x / 2.0)

    # 1) Small NCHW input matching the module spec (batch=2, channels=4, 16x16).
    x_small = jax.random.normal(key, (2, 4, 16, 16), dtype=jnp.float32) * 5.0
    y_small = jax.block_until_ready(cirm_loss(x_small, k=k, c=c))
    assert y_small.shape == x_small.shape and y_small.dtype == x_small.dtype
    assert jnp.allclose(y_small, _ref(x_small), atol=1e-5, rtol=1e-5)

    # 2) Larger input: exercises the wide-lane slab + multi-step parallel grid
    #    (split into >= 2 steps per TensorCore).
    x_big = jax.random.normal(jax.random.PRNGKey(1), (4, 8, 128, 128), dtype=jnp.float32)
    y_big = jax.block_until_ready(cirm_loss(x_big, k=k, c=c))
    assert jnp.allclose(y_big, _ref(x_big), atol=1e-5, rtol=1e-5)

    # 3) Ragged element count: exercises the sub-128-element pad + partial
    #    (masked) last block path.
    x_odd = jax.random.normal(jax.random.PRNGKey(2), (3, 5, 7, 11), dtype=jnp.float32) * 3.0
    y_odd = jax.block_until_ready(cirm_loss(x_odd, k=k, c=c))
    assert jnp.allclose(y_odd, _ref(x_odd), atol=1e-5, rtol=1e-5)

    print("KERNEL_OK")
</pallas_src>

<mosaic_0001>
module attributes {stable_mosaic.version = 11 : i64} {
  func.func @_cirm_kernel(%arg0: i32, %arg1: memref<8x256xf32, #tpu.memory_space<vmem>>, %arg2: memref<8x256xf32, #tpu.memory_space<vmem>>) attributes {dimension_semantics = [#tpu.dimension_semantics<parallel>], iteration_bounds = array<i64: 1>, scalar_prefetch = 0 : i64, scratch_operands = 0 : i64, tpu.core_type = #tpu.core_type<tc>, window_params = [{transform_indices = @transform_0, window_bounds = array<i64: 8, 256>}, {transform_indices = @transform_1, window_bounds = array<i64: 8, 256>}]} {
    %c0 = arith.constant 0 : index
    %c0_0 = arith.constant 0 : index
    %0 = vector.load %arg1[%c0, %c0_0] : memref<8x256xf32, #tpu.memory_space<vmem>>, vector<8x256xf32>
    %cst = arith.constant 5.000000e-02 : f32
    %1 = vector.broadcast %cst : f32 to vector<8x256xf32>
    %2 = arith.mulf %1, %0 : vector<8x256xf32>
    %3 = math.tanh %2 : vector<8x256xf32>
    %cst_1 = arith.constant 1.000000e+01 : f32
    %4 = vector.broadcast %cst_1 : f32 to vector<8x256xf32>
    %5 = arith.mulf %4, %3 : vector<8x256xf32>
    %c0_2 = arith.constant 0 : index
    %c0_3 = arith.constant 0 : index
    %6 = vector.load %arg2[%c0_2, %c0_3] : memref<8x256xf32, #tpu.memory_space<vmem>>, vector<8x256xf32>
    tpu.vector_store %arg2[%c0_2, %c0_3], %5 {strides = array<i32>} : memref<8x256xf32, #tpu.memory_space<vmem>>, vector<8x256xf32>,
    return
  }
  func.func @transform_0(%arg0: i32) -> (i32, i32) {
    %c0_i32 = arith.constant 0 : i32
    %c0_i32_0 = arith.constant 0 : i32
    return %arg0, %c0_i32 : i32, i32
  }
  func.func @transform_1(%arg0: i32) -> (i32, i32) {
    %c0_i32 = arith.constant 0 : i32
    %c0_i32_0 = arith.constant 0 : i32
    return %arg0, %c0_i32 : i32, i32
  }
}

</mosaic_0001>

<llo_original>
// kernel: tpu_custom_call.1
$region0: #{tpu_custom_call.1}
  #allocation0 [shape = 'u32[]', space=smem, size = 0x4, offset = 0x4, fixed_abs, tag = 'smem constant byte address 0x4 - core index']
  #allocation1 [shape = 'u32[72,128]{1,0:T(1,128)}', space=vmem, size = 0x9000, scoped, tag = 'internal scratch']
  %s0 = inlined_call_operand.hbm [shape: f32[8,256], index: 0, kind: input, shape index: {}]
  %s1 = inlined_call_operand.hbm [shape: f32[8,256], index: 1, kind: output, shape index: {}]
  %s2 = sld [smem:[#allocation0]]
  $region18: #{tpu_custom_call.1} parent=0
    _
  %s4 = ssub.s32 1, %s2
  %s5 = scalar_select 0, %s4, %s2
  $region1: #{tpu_custom_call.1} parent=0
    #allocation2 [shape = 'u8[8192]{0}', space=vmem, size = 0x2000, scoped, tag = 'input window, operand 0, single buffered']
    #allocation3 [shape = 's32[1]{0}', space=sflag, size = 0x4, scoped, tag = 'scoped memory for tpu_custom_call.1']
    #allocation4 [shape = 's32[1]{0}', space=sflag, size = 0x4, scoped, tag = 'scoped memory for tpu_custom_call.1']
    #allocation5 [shape = 'u8[8192]{0}', space=vmem, size = 0x2000, scoped, tag = 'output window, operand 0, single buffered']
    %6 = vsyncpa [#allocation3], 0
    %7 = vsyncpa [#allocation4], 0
    // Predicated region
    $region2: #{tpu_custom_call.1} parent=1 // pred_check
      _
    $region3: #{tpu_custom_call.1} parent=1 // pred_check_branch
      %9 = sbr.rel (0) target = $region5
    $region4: #{tpu_custom_call.1} parent=1 // pred_region
      %11 = vsyncadd [#allocation3], 0
      %s13 = sshll.u32 %s0, 4
      %s14 = int_to_ptr.hbm [resolvable:$true] %s13
      %s15 = sshll.u32 [#allocation2], 4
      %s16 = int_to_ptr.vmem [resolvable:$true] %s15
      %18 = dma.hbm_to_vmem [thread:$0]  %s14, 256, %s16, [#allocation3]
    $region5: #{tpu_custom_call.1} parent=1 // pred_fallthru
      _
    // Predicated region
    $region6: #{tpu_custom_call.1} parent=1 // pred_check
      _
    $region7: #{tpu_custom_call.1} parent=1 // pred_check_branch
      %20 = sbr.rel (0) target = $region9
    $region8: #{tpu_custom_call.1} parent=1 // pred_region
      %22 = dma.done [#allocation3], 256
    $region9: #{tpu_custom_call.1} parent=1 // pred_fallthru
      _
    %v23 = vld [vmem:[#allocation2] sm:$0xff]
    %v24 = vld [vmem:[#allocation2 + $0x8] sm:$0xff]
    %v25 = vmul.f32 %v23, 0.05
    %v26 = vmul.f32 %v24, 0.05
    %v27 = vtanh.pop %v25
    %v28 = vtanh.pop %v26
    %v29 = vmul.f32 %v27, 10.0
    %v30 = vmul.f32 %v28, 10.0
    %31 = vst [vmem:[#allocation5] sm:$0xff] %v29
    %32 = vst [vmem:[#allocation5 + $0x8] sm:$0xff] %v30
    // Predicated region
    $region10: #{tpu_custom_call.1} parent=1 // pred_check
      _
    $region11: #{tpu_custom_call.1} parent=1 // pred_check_branch
      %34 = sbr.rel (0) target = $region13
    $region12: #{tpu_custom_call.1} parent=1 // pred_region
      %36 = vsyncadd [#allocation4], 0
      %s38 = sshll.u32 [#allocation5], 4
      %s39 = int_to_ptr.vmem [resolvable:$true] %s38
      %s40 = sshll.u32 %s1, 4
      %s41 = int_to_ptr.hbm [resolvable:$true] %s40
      %43 = dma.vmem_to_hbm [thread:$0]  %s39, 256, %s41, [#allocation4]
    $region13: #{tpu_custom_call.1} parent=1 // pred_fallthru
      _
    // Predicated region
    $region14: #{tpu_custom_call.1} parent=1 // pred_check
      _
    $region15: #{tpu_custom_call.1} parent=1 // pred_check_branch
      %45 = sbr.rel (0) target = $region17
    $region16: #{tpu_custom_call.1} parent=1 // pred_region
      %47 = dma.done [#allocation4], 256
    $region17: #{tpu_custom_call.1} parent=1 // pred_fallthru
      _
    %48 = vsyncpa [#allocation3], 1
    %49 = vsyncpa [#allocation4], 1

</llo_original>
